<compile_context>
chip_gen: v7x
topology: tpu7x:2x2x1
jax: 0.10.0
libtpu: 0.0.40
codegen_flags: <defaults>
</compile_context>

<pallas_src>
import functools
import math

import jax
import jax.numpy as jnp
from jax.experimental import pallas as pl
from jax.experimental.pallas import tpu as pltpu

P_LOGVAR_INIT = -3.0   # BBBLinearFactorial default p_logvar_init
Q_LOGVAR_INIT = -5.0   # BBBLinearFactorial default q_logvar_init (only affects init)
_INV_2VAR_P = 1.0 / (2.0 * math.exp(P_LOGVAR_INIT))
_VMEM_LIMIT = 48 * 1024 * 1024   # < 64 MiB physical on v7x, < 128 MiB on v5e/v6e


# =============================== tiled per-layer GEMM kernel ===================
def _bbb_linear_tiled_kernel(x_ref, wT_ref, wTsqa_ref, eps_out_ref, y_ref,
                             acc_mean, acc_var, *, apply_relu):
    k = pl.program_id(2)            # in-feature (reduction) tile -- last grid axis
    nk = pl.num_programs(2)

    @pl.when(k == 0)
    def _init_acc():
        acc_mean[...] = jnp.zeros_like(acc_mean)
        acc_var[...] = jnp.zeros_like(acc_var)

    # MXU path: bf16 operands, f32 accumulation.  W^T and (alpha*W^2)^T are
    # pre-transposed / pre-squared bf16 at prep time (no per-step XLU/VALU work).
    xf = x_ref[...].astype(jnp.float32)
    xb = xf.astype(jnp.bfloat16)
    xsq = (xf * xf).astype(jnp.bfloat16)
    acc_mean[...] += jnp.dot(xb, wT_ref[...], preferred_element_type=jnp.float32)
    acc_var[...] += jnp.dot(xsq, wTsqa_ref[...], preferred_element_type=jnp.float32)

    @pl.when(k == nk - 1)
    def _finalize():
        si = jnp.sqrt(1e-8 + acc_var[...])
        out = acc_mean[...] + si * eps_out_ref[...]
        if apply_relu:
            out = jnp.maximum(out, 0.0)
        y_ref[...] = out.astype(y_ref.dtype)


def _tile(dim, pref):
    """Largest divisor of `dim` that is <= pref (never the silent full-dim fallback)."""
    if dim <= pref:
        return dim
    for t in range(pref, 0, -1):
        if dim % t == 0:
            return t
    return dim


def bbb_linear_pallas(x, layer, eps_out, apply_relu,
                      tm_pref=256, tn_pref=512, tk_pref=512):
    """One BBBLinearFactorial matmul+noise forward (tiled path). Returns y only."""
    wT, wTsqa = layer["wT"], layer["wTsqa"]
    B, K = x.shape
    _, N = wT.shape

    tm = _tile(B, tm_pref)
    tn = _tile(N, tn_pref)
    tk = _tile(K, tk_pref)
    grid = (B // tm, N // tn, K // tk)

    # Hidden layers emit bf16 (the next layer casts to bf16 for the MXU anyway).
    out_dtype = jnp.bfloat16 if apply_relu else jnp.float32

    kernel = functools.partial(_bbb_linear_tiled_kernel, apply_relu=apply_relu)
    y = pl.pallas_call(
        kernel,
        out_shape=jax.ShapeDtypeStruct((B, N), out_dtype),
        grid=grid,
        in_specs=[
            pl.BlockSpec((tm, tk), lambda i, j, k: (i, k)),       # x            (f32/bf16)
            pl.BlockSpec((tk, tn), lambda i, j, k: (k, j)),       # W^T          (bf16)
            pl.BlockSpec((tk, tn), lambda i, j, k: (k, j)),       # (alpha*W^2)^T (bf16)
            pl.BlockSpec((tm, tn), lambda i, j, k: (i, j)),       # eps_out      (f32)
        ],
        out_specs=pl.BlockSpec((tm, tn), lambda i, j, k: (i, j)),
        scratch_shapes=[pltpu.VMEM((tm, tn), jnp.float32),        # mean accumulator
                        pltpu.VMEM((tm, tn), jnp.float32)],       # variance accumulator
        compiler_params=pltpu.CompilerParams(
            dimension_semantics=("parallel", "parallel", "arbitrary"),
            vmem_limit_bytes=_VMEM_LIMIT),
    )(x, wT, wTsqa, eps_out)
    return y


# =============================== standalone KL reduce kernel ===================
def _kl_reduce_kernel(mu_ref, std_ref, eps_w_ref, kl_ref):
    @pl.when(pl.program_id(0) == 0)
    def _init():
        kl_ref[...] = jnp.zeros_like(kl_ref)
    ew = eps_w_ref[...]
    ws = mu_ref[...] + std_ref[...] * ew                       # Normalout.sample()
    # -0.5*log(2*pi) cancels between q and p; -log(std)+0.5*p_logvar hoisted to prep time.
    kl_ref[0, 0] += jnp.sum(ws * ws * _INV_2VAR_P - 0.5 * (ew * ew))


def kl_pallas(layer, eps_w, tr_pref=256):
    """Parameter-only KL term, streamed once per call (independent of batch)."""
    mu, std = layer["mu"], layer["std"]
    O, K = mu.shape
    tr = _tile(O, tr_pref)
    grid = (O // tr,)
    kl = pl.pallas_call(
        _kl_reduce_kernel,
        out_shape=jax.ShapeDtypeStruct((1, 1), jnp.float32),
        grid=grid,
        in_specs=[pl.BlockSpec((tr, K), lambda i: (i, 0))] * 3,   # mu, std, eps_w
        out_specs=pl.BlockSpec((1, 1), lambda i: (0, 0)),
        compiler_params=pltpu.CompilerParams(
            dimension_semantics=("arbitrary",),
            vmem_limit_bytes=_VMEM_LIMIT),
    )(mu, std, eps_w)
    return kl[0, 0] + layer["kl_const"]


# =============================== fully-fused small-net kernel ==================
def _fused_small_kernel(*refs, n_layers):
    # refs = [x, (wT, wTsqa, eps_out, mu, std, eps_w) * n_layers, y, kl]
    x_ref = refs[0]
    y_ref = refs[1 + 6 * n_layers]
    kl_ref = refs[2 + 6 * n_layers]

    act = x_ref[...].astype(jnp.float32)                       # stays in VMEM/vregs
    kl = jnp.zeros((1, 1), jnp.float32)
    for l in range(n_layers):
        wT_ref, wTsqa_ref, eps_out_ref, mu_ref, std_ref, eps_w_ref = \
            refs[1 + 6 * l: 7 + 6 * l]
        ab = act.astype(jnp.bfloat16)
        asq = (act * act).astype(jnp.bfloat16)
        mean = jnp.dot(ab, wT_ref[...], preferred_element_type=jnp.float32)
        var = jnp.dot(asq, wTsqa_ref[...], preferred_element_type=jnp.float32)
        si = jnp.sqrt(1e-8 + var)
        act = mean + si * eps_out_ref[...]
        if l < n_layers - 1:
            act = jnp.maximum(act, 0.0)                         # ReLU assumed (see TODO)

        ew = eps_w_ref[...]
        ws = mu_ref[...] + std_ref[...] * ew
        kl = kl + jnp.sum(ws * ws * _INV_2VAR_P - 0.5 * (ew * ew), keepdims=True)

    y_ref[...] = act.astype(y_ref.dtype)
    kl_ref[...] = kl


def _forward_fused(x, layers, eps_list):
    """All layers in one pallas_call: no inter-layer HBM round-trips, one launch.
    Only used for the module's tiny default config (3-4 feature widths), which is
    launch/padding bound regardless of tiling."""
    n = len(layers)
    B = x.shape[0]
    n_out = layers[-1]["wT"].shape[1]

    vmem = pl.BlockSpec(memory_space=pltpu.MemorySpace.VMEM)

    args = [x]
    in_specs = [vmem]
    kl_const_total = jnp.float32(0.0)
    for layer, (eps_out, eps_w) in zip(layers, eps_list):
        args += [layer["wT"], layer["wTsqa"], eps_out, layer["mu"], layer["std"], eps_w]
        in_specs += [vmem] * 6
        kl_const_total = kl_const_total + layer["kl_const"]

    kernel = functools.partial(_fused_small_kernel, n_layers=n)
    y, kl = pl.pallas_call(
        kernel,
        out_shape=(jax.ShapeDtypeStruct((B, n_out), jnp.float32),
                   jax.ShapeDtypeStruct((1, 1), jnp.float32)),
        in_specs=in_specs,
        out_specs=(vmem, vmem),
    )(*args)
    return y, kl[0, 0] + kl_const_total


# =============================== parameter init / prep =========================
def init_bbb_linear_params(key, in_features, out_features):
    """Deterministic synthetic init mirroring BBBLinearFactorial.reset_parameters."""
    stdv = 10.0 / math.sqrt(in_features)
    k1, k2, k3, k4 = jax.random.split(key, 4)
    qw_mean = jax.random.uniform(k1, (out_features, in_features), jnp.float32, -stdv, stdv)
    fc_qw_mean = jax.random.uniform(k2, (out_features, in_features), jnp.float32, -stdv, stdv)
    # NOTE: the torch init (uniform(-stdv,stdv)+q_logvar_init) makes fc_qw_std mostly
    # negative, which produces NaN in log(std); use a positive deterministic init here
    # so the KL stays finite.  Forward-pass semantics are unchanged.
    fc_qw_std = jax.random.uniform(k3, (out_features, in_features), jnp.float32, 0.05, 0.5)
    log_alpha = jax.random.uniform(k4, (1, 1), jnp.float32, -stdv, stdv)
    return dict(qw_mean=qw_mean, log_alpha=log_alpha,
                fc_qw_mean=fc_qw_mean, fc_qw_std=fc_qw_std)


def prepare_layer_params(raw, p_logvar=P_LOGVAR_INIT):
    """One-time preprocessing (amortized across all forward calls):
       - pre-transpose + bf16-cast the matmul weight,
       - fold exp(log_alpha) into a pre-squared, pre-transposed bf16 operand,
       - hoist the parameter-only KL constant sum(-log std) + 0.5*N*p_logvar."""
    W = raw["qw_mean"]                                         # (out, in) f32
    alpha = jnp.exp(raw["log_alpha"][0, 0])
    std = raw["fc_qw_std"]
    return dict(
        wT=W.T.astype(jnp.bfloat16),                           # (in, out) bf16
        wTsqa=(alpha * (W * W)).T.astype(jnp.bfloat16),        # (in, out) bf16
        mu=raw["fc_qw_mean"],                                  # (out, in) f32
        std=std,                                               # (out, in) f32
        kl_const=jnp.sum(-jnp.log(std)) + 0.5 * std.size * p_logvar,
    )


def build_network(key, n_input, n_output, n_neurons_per_layer, n_hidden_layers):
    """Layers in execution order: layer_N, ..., layer_1, layer_0 (like the torch module)."""
    dims = []
    in_f = n_input
    for _ in range(n_hidden_layers, 0, -1):
        dims.append((in_f, n_neurons_per_layer))
        in_f = n_neurons_per_layer
    dims.append((in_f, n_output))
    keys = jax.random.split(key, len(dims))
    raw = [init_bbb_linear_params(k, i, o) for k, (i, o) in zip(keys, dims)]
    prepared = [prepare_layer_params(r) for r in raw]
    return raw, prepared


def make_eps(key, batch, raw_layers):
    keys = jax.random.split(key, 2 * len(raw_layers))
    eps_list = []
    for idx, raw in enumerate(raw_layers):
        out_f, in_f = raw["qw_mean"].shape
        eps_out = jax.random.normal(keys[2 * idx], (batch, out_f), jnp.float32)
        eps_w = jax.random.normal(keys[2 * idx + 1], (out_f, in_f), jnp.float32)
        eps_list.append((eps_out, eps_w))
    return eps_list


# =============================== module forward ================================
def probabilistic_feed_forward_alternative(x, layers, eps_list, *, fuse_layers):
    """Forward of the full stack. Returns (y, total_kl)."""
    if fuse_layers:
        return _forward_fused(x, layers, eps_list)
    n = len(layers)
    kl_total = jnp.float32(0.0)
    for idx, layer in enumerate(layers):
        eps_out, eps_w = eps_list[idx]
        apply_relu = idx < n - 1                        # activation on all but layer_0
        x = bbb_linear_pallas(x, layer, eps_out, apply_relu)
        kl_total = kl_total + kl_pallas(layer, eps_w)   # batch-independent KL kernel
    return x, kl_total


# =============================== pure-JAX reference ============================
def reference_forward(x, raw_layers, eps_list, *, bf16_interlayer, p_logvar=P_LOGVAR_INIT):
    """Matches the kernels' numerics (bf16-rounded matmul operands, f32 accumulation,
    optional bf16 rounding of inter-layer activations for the tiled path)."""
    n = len(raw_layers)
    inv_2var_p = 1.0 / (2.0 * math.exp(p_logvar))
    act = x
    kl_total = jnp.float32(0.0)
    for idx, raw in enumerate(raw_layers):
        eps_out, eps_w = eps_list[idx]
        W = raw["qw_mean"]
        alpha = jnp.exp(raw["log_alpha"][0, 0])
        Wb = W.astype(jnp.bfloat16).astype(jnp.float32)
        Wsqa = (alpha * (W * W)).astype(jnp.bfloat16).astype(jnp.float32)
        ab = act.astype(jnp.bfloat16).astype(jnp.float32)
        asq = (act * act).astype(jnp.bfloat16).astype(jnp.float32)
        mean = ab @ Wb.T
        var = asq @ Wsqa.T
        si = jnp.sqrt(1e-8 + var)
        act = mean + si * eps_out
        if idx < n - 1:
            act = jnp.maximum(act, 0.0)
            if bf16_interlayer:
                act = act.astype(jnp.bfloat16).astype(jnp.float32)

        mu, std = raw["fc_qw_mean"], raw["fc_qw_std"]
        ws = mu + std * eps_w
        kl_total = kl_total + jnp.sum(-jnp.log(std) - 0.5 * (eps_w * eps_w)
                                      + 0.5 * p_logvar + ws * ws * inv_2var_p)
    return act, kl_total


def _check(name, y, y_ref, kl, kl_ref):
    assert bool(jnp.all(jnp.isfinite(y))) and bool(jnp.isfinite(kl)), f"{name}: non-finite"
    y_err = float(jnp.max(jnp.abs(y.astype(jnp.float32) - y_ref)) /
                  (jnp.max(jnp.abs(y_ref)) + 1e-6))
    kl_err = float(jnp.abs(kl - kl_ref) / (jnp.abs(kl_ref) + 1e-6))
    assert y_err < 2e-2, f"{name}: y mismatch (rel-to-max err {y_err})"
    assert kl_err < 1e-3, f"{name}: kl mismatch (rel err {kl_err})"


# =============================== main ==========================================
if __name__ == "__main__":
    key = jax.random.PRNGKey(0)
    k1, k2, k3, k4, k5, k6 = jax.random.split(key, 6)

    # --- demo config: ProbabilisticFeedForwardAlternative(16, 4, is_cuda=False,
    #                  n_neurons_per_layer=3, n_hidden_layers=2), batch=2.
    #     Uses the fully-fused single-pallas_call path.
    raw_s, prep_s = build_network(k1, n_input=16, n_output=4,
                                  n_neurons_per_layer=3, n_hidden_layers=2)
    x_s = jax.random.normal(k2, (2, 16), jnp.float32)
    eps_s = make_eps(k3, 2, raw_s)
    y_s, kl_s = probabilistic_feed_forward_alternative(x_s, prep_s, eps_s, fuse_layers=True)
    jax.block_until_ready((y_s, kl_s))
    assert y_s.shape == (2, 4)
    y_s_ref, kl_s_ref = reference_forward(x_s, raw_s, eps_s, bf16_interlayer=False)
    _check("fused-demo", y_s, y_s_ref, kl_s, kl_s_ref)

    # --- larger config exercising the tiled GEMM grid + standalone KL kernels.
    raw_l, prep_l = build_network(k4, n_input=1024, n_output=256,
                                  n_neurons_per_layer=512, n_hidden_layers=2)
    x_l = jax.random.normal(k5, (512, 1024), jnp.float32)
    eps_l = make_eps(k6, 512, raw_l)
    y_l, kl_l = probabilistic_feed_forward_alternative(x_l, prep_l, eps_l, fuse_layers=False)
    jax.block_until_ready((y_l, kl_l))
    assert y_l.shape == (512, 256)
    y_l_ref, kl_l_ref = reference_forward(x_l, raw_l, eps_l, bf16_interlayer=True)
    _check("tiled", y_l, y_l_ref, kl_l, kl_l_ref)

    print("KERNEL_OK")
</pallas_src>

<mosaic_0001>
module attributes {stable_mosaic.version = 11 : i64} {
  func.func @_fused_small_kernel(%arg0: memref<2x16xf32, #tpu.memory_space<vmem>>, %arg1: memref<16x3xbf16, #tpu.memory_space<vmem>>, %arg2: memref<16x3xbf16, #tpu.memory_space<vmem>>, %arg3: memref<2x3xf32, #tpu.memory_space<vmem>>, %arg4: memref<3x16xf32, #tpu.memory_space<vmem>>, %arg5: memref<3x16xf32, #tpu.memory_space<vmem>>, %arg6: memref<3x16xf32, #tpu.memory_space<vmem>>, %arg7: memref<3x3xbf16, #tpu.memory_space<vmem>>, %arg8: memref<3x3xbf16, #tpu.memory_space<vmem>>, %arg9: memref<2x3xf32, #tpu.memory_space<vmem>>, %arg10: memref<3x3xf32, #tpu.memory_space<vmem>>, %arg11: memref<3x3xf32, #tpu.memory_space<vmem>>, %arg12: memref<3x3xf32, #tpu.memory_space<vmem>>, %arg13: memref<3x4xbf16, #tpu.memory_space<vmem>>, %arg14: memref<3x4xbf16, #tpu.memory_space<vmem>>, %arg15: memref<2x4xf32, #tpu.memory_space<vmem>>, %arg16: memref<4x3xf32, #tpu.memory_space<vmem>>, %arg17: memref<4x3xf32, #tpu.memory_space<vmem>>, %arg18: memref<4x3xf32, #tpu.memory_space<vmem>>, %arg19: memref<2x4xf32, #tpu.memory_space<vmem>>, %arg20: memref<1x1xf32, #tpu.memory_space<vmem>>) attributes {dimension_semantics = [], scalar_prefetch = 0 : i64, scratch_operands = 0 : i64, tpu.core_type = #tpu.core_type<tc>} {
    %c0 = arith.constant 0 : index
    %c0_0 = arith.constant 0 : index
    %0 = vector.load %arg0[%c0, %c0_0] : memref<2x16xf32, #tpu.memory_space<vmem>>, vector<2x16xf32>
    %cst = arith.constant 0.000000e+00 : f32
    %1 = vector.broadcast %cst : f32 to vector<1x1xf32>
    %2 = arith.truncf %0 : vector<2x16xf32> to vector<2x16xbf16>
    %3 = arith.mulf %0, %0 : vector<2x16xf32>
    %4 = arith.truncf %3 : vector<2x16xf32> to vector<2x16xbf16>
    %c0_1 = arith.constant 0 : index
    %c0_2 = arith.constant 0 : index
    %5 = vector.load %arg1[%c0_1, %c0_2] : memref<16x3xbf16, #tpu.memory_space<vmem>>, vector<16x3xbf16>
    %cst_3 = arith.constant dense<0.000000e+00> : vector<2x3xf32>
    %6 = tpu.matmul %2, %5, %cst_3 {dimension_numbers = #tpu.dot_dimension_numbers<[1], [0], [0], [1], [0, 0, 1, 1], [], []>} : vector<2x16xbf16>, vector<16x3xbf16>, vector<2x3xf32> -> vector<2x3xf32>
    %c0_4 = arith.constant 0 : index
    %c0_5 = arith.constant 0 : index
    %7 = vector.load %arg2[%c0_4, %c0_5] : memref<16x3xbf16, #tpu.memory_space<vmem>>, vector<16x3xbf16>
    %cst_6 = arith.constant dense<0.000000e+00> : vector<2x3xf32>
    %8 = tpu.matmul %4, %7, %cst_6 {dimension_numbers = #tpu.dot_dimension_numbers<[1], [0], [0], [1], [0, 0, 1, 1], [], []>} : vector<2x16xbf16>, vector<16x3xbf16>, vector<2x3xf32> -> vector<2x3xf32>
    %cst_7 = arith.constant 9.99999993E-9 : f32
    %9 = vector.broadcast %cst_7 : f32 to vector<2x3xf32>
    %10 = arith.addf %9, %8 : vector<2x3xf32>
    %11 = math.sqrt %10 : vector<2x3xf32>
    %c0_8 = arith.constant 0 : index
    %c0_9 = arith.constant 0 : index
    %12 = vector.load %arg3[%c0_8, %c0_9] : memref<2x3xf32, #tpu.memory_space<vmem>>, vector<2x3xf32>
    %13 = arith.mulf %11, %12 : vector<2x3xf32>
    %14 = arith.addf %6, %13 : vector<2x3xf32>
    %cst_10 = arith.constant 0.000000e+00 : f32
    %15 = vector.broadcast %cst_10 : f32 to vector<2x3xf32>
    %16 = arith.maximumf %14, %15 : vector<2x3xf32>
    %c0_11 = arith.constant 0 : index
    %c0_12 = arith.constant 0 : index
    %17 = vector.load %arg6[%c0_11, %c0_12] : memref<3x16xf32, #tpu.memory_space<vmem>>, vector<3x16xf32>
    %c0_13 = arith.constant 0 : index
    %c0_14 = arith.constant 0 : index
    %18 = vector.load %arg4[%c0_13, %c0_14] : memref<3x16xf32, #tpu.memory_space<vmem>>, vector<3x16xf32>
    %c0_15 = arith.constant 0 : index
    %c0_16 = arith.constant 0 : index
    %19 = vector.load %arg5[%c0_15, %c0_16] : memref<3x16xf32, #tpu.memory_space<vmem>>, vector<3x16xf32>
    %20 = arith.mulf %19, %17 : vector<3x16xf32>
    %21 = arith.addf %18, %20 : vector<3x16xf32>
    %22 = arith.mulf %21, %21 : vector<3x16xf32>
    %cst_17 = arith.constant 10.0427685 : f32
    %23 = vector.broadcast %cst_17 : f32 to vector<3x16xf32>
    %24 = arith.mulf %22, %23 : vector<3x16xf32>
    %25 = arith.mulf %17, %17 : vector<3x16xf32>
    %cst_18 = arith.constant 5.000000e-01 : f32
    %26 = vector.broadcast %cst_18 : f32 to vector<3x16xf32>
    %27 = arith.mulf %26, %25 : vector<3x16xf32>
    %28 = arith.subf %24, %27 : vector<3x16xf32>
    %29 = vector.shape_cast %28 : vector<3x16xf32> to vector<1x3x16xf32>
    %cst_19 = arith.constant dense<0.000000e+00> : vector<1xf32>
    %30 = vector.multi_reduction <add>, %29, %cst_19 [1, 2] : vector<1x3x16xf32> to vector<1xf32>
    %31 = vector.shape_cast %30 : vector<1xf32> to vector<1x1x1xf32>
    %32 = vector.extract %31[0, 0, 0] : f32 from vector<1x1x1xf32>
    %33 = vector.broadcast %32 : f32 to vector<1x1xf32>
    %34 = arith.addf %1, %33 : vector<1x1xf32>
    %35 = arith.truncf %16 : vector<2x3xf32> to vector<2x3xbf16>
    %36 = arith.mulf %16, %16 : vector<2x3xf32>
    %37 = arith.truncf %36 : vector<2x3xf32> to vector<2x3xbf16>
    %c0_20 = arith.constant 0 : index
    %c0_21 = arith.constant 0 : index
    %38 = vector.load %arg7[%c0_20, %c0_21] : memref<3x3xbf16, #tpu.memory_space<vmem>>, vector<3x3xbf16>
    %cst_22 = arith.constant dense<0.000000e+00> : vector<2x3xf32>
    %39 = tpu.matmul %35, %38, %cst_22 {dimension_numbers = #tpu.dot_dimension_numbers<[1], [0], [0], [1], [0, 0, 1, 1], [], []>} : vector<2x3xbf16>, vector<3x3xbf16>, vector<2x3xf32> -> vector<2x3xf32>
    %c0_23 = arith.constant 0 : index
    %c0_24 = arith.constant 0 : index
    %40 = vector.load %arg8[%c0_23, %c0_24] : memref<3x3xbf16, #tpu.memory_space<vmem>>, vector<3x3xbf16>
    %cst_25 = arith.constant dense<0.000000e+00> : vector<2x3xf32>
    %41 = tpu.matmul %37, %40, %cst_25 {dimension_numbers = #tpu.dot_dimension_numbers<[1], [0], [0], [1], [0, 0, 1, 1], [], []>} : vector<2x3xbf16>, vector<3x3xbf16>, vector<2x3xf32> -> vector<2x3xf32>
    %cst_26 = arith.constant 9.99999993E-9 : f32
    %42 = vector.broadcast %cst_26 : f32 to vector<2x3xf32>
    %43 = arith.addf %42, %41 : vector<2x3xf32>
    %44 = math.sqrt %43 : vector<2x3xf32>
    %c0_27 = arith.constant 0 : index
    %c0_28 = arith.constant 0 : index
    %45 = vector.load %arg9[%c0_27, %c0_28] : memref<2x3xf32, #tpu.memory_space<vmem>>, vector<2x3xf32>
    %46 = arith.mulf %44, %45 : vector<2x3xf32>
    %47 = arith.addf %39, %46 : vector<2x3xf32>
    %cst_29 = arith.constant 0.000000e+00 : f32
    %48 = vector.broadcast %cst_29 : f32 to vector<2x3xf32>
    %49 = arith.maximumf %47, %48 : vector<2x3xf32>
    %c0_30 = arith.constant 0 : index
    %c0_31 = arith.constant 0 : index
    %50 = vector.load %arg12[%c0_30, %c0_31] : memref<3x3xf32, #tpu.memory_space<vmem>>, vector<3x3xf32>
    %c0_32 = arith.constant 0 : index
    %c0_33 = arith.constant 0 : index
    %51 = vector.load %arg10[%c0_32, %c0_33] : memref<3x3xf32, #tpu.memory_space<vmem>>, vector<3x3xf32>
    %c0_34 = arith.constant 0 : index
    %c0_35 = arith.constant 0 : index
    %52 = vector.load %arg11[%c0_34, %c0_35] : memref<3x3xf32, #tpu.memory_space<vmem>>, vector<3x3xf32>
    %53 = arith.mulf %52, %50 : vector<3x3xf32>
    %54 = arith.addf %51, %53 : vector<3x3xf32>
    %55 = arith.mulf %54, %54 : vector<3x3xf32>
    %cst_36 = arith.constant 10.0427685 : f32
    %56 = vector.broadcast %cst_36 : f32 to vector<3x3xf32>
    %57 = arith.mulf %55, %56 : vector<3x3xf32>
    %58 = arith.mulf %50, %50 : vector<3x3xf32>
    %cst_37 = arith.constant 5.000000e-01 : f32
    %59 = vector.broadcast %cst_37 : f32 to vector<3x3xf32>
    %60 = arith.mulf %59, %58 : vector<3x3xf32>
    %61 = arith.subf %57, %60 : vector<3x3xf32>
    %62 = vector.shape_cast %61 : vector<3x3xf32> to vector<1x3x3xf32>
    %cst_38 = arith.constant dense<0.000000e+00> : vector<1xf32>
    %63 = vector.multi_reduction <add>, %62, %cst_38 [1, 2] : vector<1x3x3xf32> to vector<1xf32>
    %64 = vector.shape_cast %63 : vector<1xf32> to vector<1x1x1xf32>
    %65 = vector.extract %64[0, 0, 0] : f32 from vector<1x1x1xf32>
    %66 = vector.broadcast %65 : f32 to vector<1x1xf32>
    %67 = arith.addf %34, %66 : vector<1x1xf32>
    %68 = arith.truncf %49 : vector<2x3xf32> to vector<2x3xbf16>
    %69 = arith.mulf %49, %49 : vector<2x3xf32>
    %70 = arith.truncf %69 : vector<2x3xf32> to vector<2x3xbf16>
    %c0_39 = arith.constant 0 : index
    %c0_40 = arith.constant 0 : index
    %71 = vector.load %arg13[%c0_39, %c0_40] : memref<3x4xbf16, #tpu.memory_space<vmem>>, vector<3x4xbf16>
    %cst_41 = arith.constant dense<0.000000e+00> : vector<2x4xf32>
    %72 = tpu.matmul %68, %71, %cst_41 {dimension_numbers = #tpu.dot_dimension_numbers<[1], [0], [0], [1], [0, 0, 1, 1], [], []>} : vector<2x3xbf16>, vector<3x4xbf16>, vector<2x4xf32> -> vector<2x4xf32>
    %c0_42 = arith.constant 0 : index
    %c0_43 = arith.constant 0 : index
    %73 = vector.load %arg14[%c0_42, %c0_43] : memref<3x4xbf16, #tpu.memory_space<vmem>>, vector<3x4xbf16>
    %cst_44 = arith.constant dense<0.000000e+00> : vector<2x4xf32>
    %74 = tpu.matmul %70, %73, %cst_44 {dimension_numbers = #tpu.dot_dimension_numbers<[1], [0], [0], [1], [0, 0, 1, 1], [], []>} : vector<2x3xbf16>, vector<3x4xbf16>, vector<2x4xf32> -> vector<2x4xf32>
    %cst_45 = arith.constant 9.99999993E-9 : f32
    %75 = vector.broadcast %cst_45 : f32 to vector<2x4xf32>
    %76 = arith.addf %75, %74 : vector<2x4xf32>
    %77 = math.sqrt %76 : vector<2x4xf32>
    %c0_46 = arith.constant 0 : index
    %c0_47 = arith.constant 0 : index
    %78 = vector.load %arg15[%c0_46, %c0_47] : memref<2x4xf32, #tpu.memory_space<vmem>>, vector<2x4xf32>
    %79 = arith.mulf %77, %78 : vector<2x4xf32>
    %80 = arith.addf %72, %79 : vector<2x4xf32>
    %c0_48 = arith.constant 0 : index
    %c0_49 = arith.constant 0 : index
    %81 = vector.load %arg18[%c0_48, %c0_49] : memref<4x3xf32, #tpu.memory_space<vmem>>, vector<4x3xf32>
    %c0_50 = arith.constant 0 : index
    %c0_51 = arith.constant 0 : index
    %82 = vector.load %arg16[%c0_50, %c0_51] : memref<4x3xf32, #tpu.memory_space<vmem>>, vector<4x3xf32>
    %c0_52 = arith.constant 0 : index
    %c0_53 = arith.constant 0 : index
    %83 = vector.load %arg17[%c0_52, %c0_53] : memref<4x3xf32, #tpu.memory_space<vmem>>, vector<4x3xf32>
    %84 = arith.mulf %83, %81 : vector<4x3xf32>
    %85 = arith.addf %82, %84 : vector<4x3xf32>
    %86 = arith.mulf %85, %85 : vector<4x3xf32>
    %cst_54 = arith.constant 10.0427685 : f32
    %87 = vector.broadcast %cst_54 : f32 to vector<4x3xf32>
    %88 = arith.mulf %86, %87 : vector<4x3xf32>
    %89 = arith.mulf %81, %81 : vector<4x3xf32>
    %cst_55 = arith.constant 5.000000e-01 : f32
    %90 = vector.broadcast %cst_55 : f32 to vector<4x3xf32>
    %91 = arith.mulf %90, %89 : vector<4x3xf32>
    %92 = arith.subf %88, %91 : vector<4x3xf32>
    %93 = vector.shape_cast %92 : vector<4x3xf32> to vector<1x4x3xf32>
    %cst_56 = arith.constant dense<0.000000e+00> : vector<1xf32>
    %94 = vector.multi_reduction <add>, %93, %cst_56 [1, 2] : vector<1x4x3xf32> to vector<1xf32>
    %95 = vector.shape_cast %94 : vector<1xf32> to vector<1x1x1xf32>
    %96 = vector.extract %95[0, 0, 0] : f32 from vector<1x1x1xf32>
    %97 = vector.broadcast %96 : f32 to vector<1x1xf32>
    %98 = arith.addf %67, %97 : vector<1x1xf32>
    %c0_57 = arith.constant 0 : index
    %c0_58 = arith.constant 0 : index
    %99 = vector.load %arg19[%c0_57, %c0_58] : memref<2x4xf32, #tpu.memory_space<vmem>>, vector<2x4xf32>
    tpu.vector_store %arg19[%c0_57, %c0_58], %80 {strides = array<i32>} : memref<2x4xf32, #tpu.memory_space<vmem>>, vector<2x4xf32>,
    %c0_59 = arith.constant 0 : index
    %c0_60 = arith.constant 0 : index
    %100 = vector.load %arg20[%c0_59, %c0_60] : memref<1x1xf32, #tpu.memory_space<vmem>>, vector<1x1xf32>
    tpu.vector_store %arg20[%c0_59, %c0_60], %98 {strides = array<i32>} : memref<1x1xf32, #tpu.memory_space<vmem>>, vector<1x1xf32>,
    return
  }
}

</mosaic_0001>

<llo_original>
// kernel: tpu_custom_call.1
$region0: #{tpu_custom_call.1}
  #allocation0 [shape = 'u32[]', space=smem, size = 0x4, offset = 0x4, fixed_abs, tag = 'smem constant byte address 0x4 - core index']
  #allocation1 [shape = 'u32[144,128]{1,0:T(1,128)}', space=vmem, size = 0x12000, scoped, tag = 'internal scratch']
  %s0 = inlined_call_operand.hbm [shape: f32[2,16], index: 0, kind: input, shape index: {}]
  %s1 = inlined_call_operand.vmem [shape: bf16[16,3], index: 1, kind: input, shape index: {}]
  %s2 = inlined_call_operand.vmem [shape: bf16[16,3], index: 2, kind: input, shape index: {}]
  %s3 = inlined_call_operand.hbm [shape: f32[2,3], index: 3, kind: input, shape index: {}]
  %s4 = inlined_call_operand.vmem [shape: f32[3,16], index: 4, kind: input, shape index: {}]
  %s5 = inlined_call_operand.vmem [shape: f32[3,16], index: 5, kind: input, shape index: {}]
  %s6 = inlined_call_operand.vmem [shape: f32[3,16], index: 6, kind: input, shape index: {}]
  %s7 = inlined_call_operand.vmem [shape: bf16[3,3], index: 7, kind: input, shape index: {}]
  %s8 = inlined_call_operand.vmem [shape: bf16[3,3], index: 8, kind: input, shape index: {}]
  %s9 = inlined_call_operand.vmem [shape: f32[2,3], index: 9, kind: input, shape index: {}]
  %s10 = inlined_call_operand.vmem [shape: f32[3,3], index: 10, kind: input, shape index: {}]
  %s11 = inlined_call_operand.vmem [shape: f32[3,3], index: 11, kind: input, shape index: {}]
  %s12 = inlined_call_operand.vmem [shape: f32[3,3], index: 12, kind: input, shape index: {}]
  %s13 = inlined_call_operand.vmem [shape: bf16[3,4], index: 13, kind: input, shape index: {}]
  %s14 = inlined_call_operand.vmem [shape: bf16[3,4], index: 14, kind: input, shape index: {}]
  %s15 = inlined_call_operand.vmem [shape: f32[2,4], index: 15, kind: input, shape index: {}]
  %s16 = inlined_call_operand.vmem [shape: f32[4,3], index: 16, kind: input, shape index: {}]
  %s17 = inlined_call_operand.vmem [shape: f32[4,3], index: 17, kind: input, shape index: {}]
  %s18 = inlined_call_operand.vmem [shape: f32[4,3], index: 18, kind: input, shape index: {}]
  %s19 = inlined_call_operand.hbm [shape: f32[2,4], index: 19, kind: output, shape index: {0}]
  %s20 = inlined_call_operand.hbm [shape: f32[1,1], index: 20, kind: output, shape index: {1}]
  %21 = xla_tuple %s19, %s20
  %s22 = sld [smem:[#allocation0]]
  $region102: #{tpu_custom_call.1} parent=0
    _
  %s24 = ssub.s32 1, %s22
  %s25 = scalar_select 0, %s24, %s22
  $region1: #{tpu_custom_call.1} parent=0
    #allocation2 [shape = 'u8[1024]{0}', space=vmem, size = 0x400, scoped, tag = 'input window, operand 0, single buffered']
    #allocation3 [shape = 's32[1]{0}', space=sflag, size = 0x4, scoped, tag = 'scoped memory for tpu_custom_call.1']
    #allocation4 [shape = 's32[1]{0}', space=sflag, size = 0x4, scoped, tag = 'scoped memory for tpu_custom_call.1']
    #allocation5 [shape = 'u8[1024]{0}', space=vmem, size = 0x400, scoped, tag = 'input window, operand 3, single buffered']
    #allocation6 [shape = 's32[1]{0}', space=sflag, size = 0x4, scoped, tag = 'scoped memory for tpu_custom_call.1']
    #allocation7 [shape = 'u8[1024]{0}', space=vmem, size = 0x400, scoped, tag = 'output window, operand 0, single buffered']
    #allocation8 [shape = 'u8[512]{0}', space=vmem, size = 0x400, scoped, tag = 'output window, operand 1, single buffered']
    #allocation9 [shape = 's32[1]{0}', space=sflag, size = 0x4, scoped, tag = 'scoped memory for tpu_custom_call.1']
    %26 = vsyncpa [#allocation3], 0
    %27 = vsyncpa [#allocation6], 0
    %28 = vsyncpa [#allocation4], 0
    %29 = vsyncpa [#allocation9], 0
    // Predicated region
    $region2: #{tpu_custom_call.1} parent=1 // pred_check
      _
    $region3: #{tpu_custom_call.1} parent=1 // pred_check_branch
      %31 = sbr.rel (0) target = $region5
    $region4: #{tpu_custom_call.1} parent=1 // pred_region
      %s33 = ssub.s32 32, 32
      %34 = vsyncadd [#allocation3], %s33
      %s36 = sshll.u32 [#allocation2], 4
      %s37 = int_to_ptr.vmem [resolvable:$true] %s36
      %39 = dma.hbm_to_vmem [thread:$0]  %s0, 32, %s37, [#allocation3]
    $region5: #{tpu_custom_call.1} parent=1 // pred_fallthru
      _
    // Predicated region
    $region6: #{tpu_custom_call.1} parent=1 // pred_check
      _
    $region7: #{tpu_custom_call.1} parent=1 // pred_check_branch
      %41 = sbr.rel (0) target = $region9
    $region8: #{tpu_custom_call.1} parent=1 // pred_region
      _
    $region9: #{tpu_custom_call.1} parent=1 // pred_fallthru
      _
    // Predicated region
    $region10: #{tpu_custom_call.1} parent=1 // pred_check
      _
    $region11: #{tpu_custom_call.1} parent=1 // pred_check_branch
      %43 = sbr.rel (0) target = $region13
    $region12: #{tpu_custom_call.1} parent=1 // pred_region
      _
    $region13: #{tpu_custom_call.1} parent=1 // pred_fallthru
      _
    // Predicated region
    $region14: #{tpu_custom_call.1} parent=1 // pred_check
      _
    $region15: #{tpu_custom_call.1} parent=1 // pred_check_branch
      %45 = sbr.rel (0) target = $region17
    $region16: #{tpu_custom_call.1} parent=1 // pred_region
      %s47 = ssub.s32 32, 32
      %48 = vsyncadd [#allocation6], %s47
      %s50 = sshll.u32 [#allocation5], 4
      %s51 = int_to_ptr.vmem [resolvable:$true] %s50
      %53 = dma.hbm_to_vmem [thread:$0]  %s3, 32, %s51, [#allocation6]
    $region17: #{tpu_custom_call.1} parent=1 // pred_fallthru
      _
    // Predicated region
    $region18: #{tpu_custom_call.1} parent=1 // pred_check
      _
    $region19: #{tpu_custom_call.1} parent=1 // pred_check_branch
      %55 = sbr.rel (0) target = $region21
    $region20: #{tpu_custom_call.1} parent=1 // pred_region
      _
    $region21: #{tpu_custom_call.1} parent=1 // pred_fallthru
      _
    // Predicated region
    $region22: #{tpu_custom_call.1} parent=1 // pred_check
      _
    $region23: #{tpu_custom_call.1} parent=1 // pred_check_branch
      %57 = sbr.rel (0) target = $region25
    $region24: #{tpu_custom_call.1} parent=1 // pred_region
      _
    $region25: #{tpu_custom_call.1} parent=1 // pred_fallthru
      _
    // Predicated region
    $region26: #{tpu_custom_call.1} parent=1 // pred_check
      _
    $region27: #{tpu_custom_call.1} parent=1 // pred_check_branch
      %59 = sbr.rel (0) target = $region29
    $region28: #{tpu_custom_call.1} parent=1 // pred_region
      _
    $region29: #{tpu_custom_call.1} parent=1 // pred_fallthru
      _
    // Predicated region
    $region30: #{tpu_custom_call.1} parent=1 // pred_check
      _
    $region31: #{tpu_custom_call.1} parent=1 // pred_check_branch
      %61 = sbr.rel (0) target = $region33
    $region32: #{tpu_custom_call.1} parent=1 // pred_region
      _
    $region33: #{tpu_custom_call.1} parent=1 // pred_fallthru
      _
    // Predicated region
    $region34: #{tpu_custom_call.1} parent=1 // pred_check
      _
    $region35: #{tpu_custom_call.1} parent=1 // pred_check_branch
      %63 = sbr.rel (0) target = $region37
    $region36: #{tpu_custom_call.1} parent=1 // pred_region
      _
    $region37: #{tpu_custom_call.1} parent=1 // pred_fallthru
      _
    // Predicated region
    $region38: #{tpu_custom_call.1} parent=1 // pred_check
      _
    $region39: #{tpu_custom_call.1} parent=1 // pred_check_branch
      %65 = sbr.rel (0) target = $region41
    $region40: #{tpu_custom_call.1} parent=1 // pred_region
      _
    $region41: #{tpu_custom_call.1} parent=1 // pred_fallthru
      _
    // Predicated region
    $region42: #{tpu_custom_call.1} parent=1 // pred_check
      _
    $region43: #{tpu_custom_call.1} parent=1 // pred_check_branch
      %67 = sbr.rel (0) target = $region45
    $region44: #{tpu_custom_call.1} parent=1 // pred_region
      _
    $region45: #{tpu_custom_call.1} parent=1 // pred_fallthru
      _
    // Predicated region
    $region46: #{tpu_custom_call.1} parent=1 // pred_check
      _
    $region47: #{tpu_custom_call.1} parent=1 // pred_check_branch
      %69 = sbr.rel (0) target = $region49
    $region48: #{tpu_custom_call.1} parent=1 // pred_region
      _
    $region49: #{tpu_custom_call.1} parent=1 // pred_fallthru
      _
    // Predicated region
    $region50: #{tpu_custom_call.1} parent=1 // pred_check
      _
    $region51: #{tpu_custom_call.1} parent=1 // pred_check_branch
      %71 = sbr.rel (0) target = $region53
    $region52: #{tpu_custom_call.1} parent=1 // pred_region
      _
    $region53: #{tpu_custom_call.1} parent=1 // pred_fallthru
      _
    // Predicated region
    $region54: #{tpu_custom_call.1} parent=1 // pred_check
      _
    $region55: #{tpu_custom_call.1} parent=1 // pred_check_branch
      %73 = sbr.rel (0) target = $region57
    $region56: #{tpu_custom_call.1} parent=1 // pred_region
      _
    $region57: #{tpu_custom_call.1} parent=1 // pred_fallthru
      _
    // Predicated region
    $region58: #{tpu_custom_call.1} parent=1 // pred_check
      _
    $region59: #{tpu_custom_call.1} parent=1 // pred_check_branch
      %75 = sbr.rel (0) target = $region61
    $region60: #{tpu_custom_call.1} parent=1 // pred_region
      _
    $region61: #{tpu_custom_call.1} parent=1 // pred_fallthru
      _
    // Predicated region
    $region62: #{tpu_custom_call.1} parent=1 // pred_check
      _
    $region63: #{tpu_custom_call.1} parent=1 // pred_check_branch
      %77 = sbr.rel (0) target = $region65
    $region64: #{tpu_custom_call.1} parent=1 // pred_region
      _
    $region65: #{tpu_custom_call.1} parent=1 // pred_fallthru
      _
    // Predicated region
    $region66: #{tpu_custom_call.1} parent=1 // pred_check
      _
    $region67: #{tpu_custom_call.1} parent=1 // pred_check_branch
      %79 = sbr.rel (0) target = $region69
    $region68: #{tpu_custom_call.1} parent=1 // pred_region
      _
    $region69: #{tpu_custom_call.1} parent=1 // pred_fallthru
      _
    // Predicated region
    $region70: #{tpu_custom_call.1} parent=1 // pred_check
      _
    $region71: #{tpu_custom_call.1} parent=1 // pred_check_branch
      %81 = sbr.rel (0) target = $region73
    $region72: #{tpu_custom_call.1} parent=1 // pred_region
      _
    $region73: #{tpu_custom_call.1} parent=1 // pred_fallthru
      _
    // Predicated region
    $region74: #{tpu_custom_call.1} parent=1 // pred_check
      _
    $region75: #{tpu_custom_call.1} parent=1 // pred_check_branch
      %83 = sbr.rel (0) target = $region77
    $region76: #{tpu_custom_call.1} parent=1 // pred_region
      _
    $region77: #{tpu_custom_call.1} parent=1 // pred_fallthru
      _
    // Predicated region
    $region78: #{tpu_custom_call.1} parent=1 // pred_check
      _
    $region79: #{tpu_custom_call.1} parent=1 // pred_check_branch
      %85 = sbr.rel (0) target = $region81
    $region80: #{tpu_custom_call.1} parent=1 // pred_region
      %86 = dma.done [#allocation3], 32
    $region81: #{tpu_custom_call.1} parent=1 // pred_fallthru
      _
    // Predicated region
    $region82: #{tpu_custom_call.1} parent=1 // pred_check
      _
    $region83: #{tpu_custom_call.1} parent=1 // pred_check_branch
      %88 = sbr.rel (0) target = $region85
    $region84: #{tpu_custom_call.1} parent=1 // pred_region
      %89 = dma.done [#allocation6], 32
    $region85: #{tpu_custom_call.1} parent=1 // pred_fallthru
      _
    %v91 = vld [vmem:[#allocation2] sm:$0x3]
    %v92 = vpack.c.bf16 %v91, %v91
    %v93 = vmul.f32 %v91, %v91
    %v94 = vpack.c.bf16 %v93, %v93
    %v95 = vld [vmem:[%s1] sm:$0xf]
    %v96 = vld [vmem:[%s1 + $0x4] sm:$0xf]
    %v97 = vld [vmem:[%s2] sm:$0xf]
    %v98 = vld [vmem:[%s2 + $0x4] sm:$0xf]
    %v101 = vunpack.c.l.b16 %v97
    %v102 = vunpack.c.l.b16 %v98
    %v103 = vpack.c.b16 %v102, %v101
    %vm105 = vcmask 130048
    %v107 = vsel %vm105, %v94, 0
    %109 = vmatprep.subr.bf16.mxu0 0
    %110 = vmatpush1.bf16.msra.mxu0 %v103
    %111 = vmatprep.subr.bf16.mxu0 0
    %112 = vmatpush1.bf16.msra.mxu0 0
    %113 = vmatprep.subr.bf16.mxu0 0
    %114 = vmatpush1.bf16.msra.mxu0 0
    %115 = vmatprep.subr.bf16.mxu0 0
    %116 = vmatpush1.bf16.msra.mxu0 0
    %117 = vmatprep.subr.bf16.mxu0 0
    %118 = vmatpush1.bf16.msra.mxu0 0
    %119 = vmatprep.subr.bf16.mxu0 0
    %120 = vmatpush1.bf16.msra.mxu0 0
    %121 = vmatprep.subr.bf16.mxu0 0
    %122 = vmatpush1.bf16.msra.mxu0 0
    %123 = vmatprep.subr.bf16.mxu0 0
    %124 = vmatpush1.bf16.msra.mxu0 0
    %125 = vmatprep.subr.bf16.mxu0 0
    %126 = vmatpush1.bf16.msra.mxu0 0
    %127 = vmatprep.subr.bf16.mxu0 0
    %128 = vmatpush1.bf16.msra.mxu0 0
    %129 = vmatprep.subr.bf16.mxu0 0
    %130 = vmatpush1.bf16.msra.mxu0 0
    %131 = vmatprep.subr.bf16.mxu0 0
    %132 = vmatpush1.bf16.msra.mxu0 0
    %133 = vmatprep.subr.bf16.mxu0 0
    %134 = vmatpush1.bf16.msra.mxu0 0
    %135 = vmatprep.subr.bf16.mxu0 0
    %136 = vmatpush1.bf16.msra.mxu0 0
    %137 = vmatprep.subr.bf16.mxu0 0
    %138 = vmatpush1.bf16.msra.mxu0 0
    %139 = vmatprep.subr.bf16.mxu0 0
    %140 = vmatpush1.bf16.msra.mxu0 0
    %141 = vmatprep.mubr.bf16.mxu0 0
    %142 = vmatmul.mubr.bf16.gmra.mrb[0].mxu0 %v107
    %v143 = vpop.f32.mrb[0].mxu0
    %v144 = vadd.f32 1e-08, %v143
    %v145 = vpop.f32.mrb[0].mxu0
    %v146 = vpop.f32.mrb[0].mxu0
    %v147 = vpop.f32.mrb[0].mxu0
    %148 = vdwg.mxu0
    %v149 = vrsqrt.pop %v144
    %v150 = vmul.f32 %v144, %v149
    %vm151 = vcmp.eq.f32.partialorder %v144, inf
    %v152 = vsel %vm151, %v144, %v150
    %vm153 = vcmp.eq.f32.partialorder %v144, 0.0
    %v154 = vand.u32 %v144, 2147483648
    %v155 = vsel %vm153, %v154, %v152
    %v156 = vld [vmem:[#allocation5] sm:$0x3]
    %v157 = vmul.f32 %v155, %v156
    %v160 = vunpack.c.l.b16 %v95
    %v161 = vunpack.c.l.b16 %v96
    %v162 = vpack.c.b16 %v161, %v160
    %v165 = vsel %vm105, %v92, 0
    %167 = vmatprep.subr.bf16.mxu0 0
    %168 = vmatpush1.bf16.msra.mxu0 %v162
    %169 = vmatprep.subr.bf16.mxu0 0
    %170 = vmatpush1.bf16.msra.mxu0 0
    %171 = vmatprep.subr.bf16.mxu0 0
    %172 = vmatpush1.bf16.msra.mxu0 0
    %173 = vmatprep.subr.bf16.mxu0 0
    %174 = vmatpush1.bf16.msra.mxu0 0
    %175 = vmatprep.subr.bf16.mxu0 0
    %176 = vmatpush1.bf16.msra.mxu0 0
    %177 = vmatprep.subr.bf16.mxu0 0
    %178 = vmatpush1.bf16.msra.mxu0 0
    %179 = vmatprep.subr.bf16.mxu0 0
    %180 = vmatpush1.bf16.msra.mxu0 0
    %181 = vmatprep.subr.bf16.mxu0 0
    %182 = vmatpush1.bf16.msra.mxu0 0
    %183 = vmatprep.subr.bf16.mxu0 0
    %184 = vmatpush1.bf16.msra.mxu0 0
    %185 = vmatprep.subr.bf16.mxu0 0
    %186 = vmatpush1.bf16.msra.mxu0 0
    %187 = vmatprep.subr.bf16.mxu0 0
    %188 = vmatpush1.bf16.msra.mxu0 0
    %189 = vmatprep.subr.bf16.mxu0 0
    %190 = vmatpush1.bf16.msra.mxu0 0
    %191 = vmatprep.subr.bf16.mxu0 0
    %192 = vmatpush1.bf16.msra.mxu0 0
    %193 = vmatprep.subr.bf16.mxu0 0
    %194 = vmatpush1.bf16.msra.mxu0 0
    %195 = vmatprep.subr.bf16.mxu0 0
    %196 = vmatpush1.bf16.msra.mxu0 0
    %197 = vmatprep.subr.bf16.mxu0 0
    %198 = vmatpush1.bf16.msra.mxu0 0
    %199 = vmatprep.mubr.bf16.mxu0 0
    %200 = vmatmul.mubr.bf16.gmra.mrb[0].mxu0 %v165
    %v201 = vpop.f32.mrb[0].mxu0
    %v202 = vadd.f32 %v157, %v201
    %v203 = vpop.f32.mrb[0].mxu0
    %v204 = vpop.f32.mrb[0].mxu0
    %v205 = vpop.f32.mrb[0].mxu0
    %206 = vdwg.mxu0
    %v207 = vmax.f32 %v202, 0.0
    %v208 = vld [vmem:[%s6] sm:$0x7]
    %v209 = vld [vmem:[%s4] sm:$0x7]
    %v210 = vld [vmem:[%s5] sm:$0x7]
    %v211 = vmul.f32 %v210, %v208
    %v212 = vadd.f32 %v209, %v211
    %v213 = vmul.f32 %v212, %v212
    %v214 = vmul.f32 %v213, 10.0427685
    %v215 = vmul.f32 %v208, %v208
    %v216 = vmul.f32 %v215, 0.5
    %v217 = vsub.f32 %v214, %v216
    %vm218 = vcmask 124928
    %v219 = vsel %vm218, %v217, 0.0
    %220 = vadd.xlane.f32.xlu0 %v219
    %v221 = vpop.xlane.xlu0 %220
    %v222 = vrot.slane %v221, 4
    %v223 = vadd.f32 %v221, %v222
    %v224 = vrot.slane %v223, 2
    %v225 = vadd.f32 %v223, %v224
    %v226 = vrot.slane %v225, 1
    %v227 = vadd.f32 %v225, %v226
    %s228 = vtos %v227
    %v229 = vstv %s228
    %v230 = vadd.f32 %v229, 0.0
    %v231 = vpack.c.bf16 %v207, %v207
    %v232 = vmul.f32 %v207, %v207
    %v233 = vpack.c.bf16 %v232, %v232
    %v234 = vld [vmem:[%s7] sm:$0x3]
    %v235 = vld [vmem:[%s8] sm:$0x3]
    %vm236 = vcmask 23552
    %v238 = vsel %vm236, %v233, 0
    %vm240 = vcmask 1040384
    %vm241 = vcmask 1041408
    %v242 = vsel %vm240, 4294967295, 65535
    %v243 = vsel %vm241, %v242, 0
    %v245 = vand.u32 %v235, %v243
    %247 = vmatprep.subr.bf16.mxu0 0
    %248 = vmatpush1.bf16.msra.mxu0 %v245
    %249 = vmatprep.subr.bf16.mxu0 0
    %250 = vmatpush1.bf16.msra.mxu0 0
    %251 = vmatprep.subr.bf16.mxu0 0
    %252 = vmatpush1.bf16.msra.mxu0 0
    %253 = vmatprep.subr.bf16.mxu0 0
    %254 = vmatpush1.bf16.msra.mxu0 0
    %255 = vmatprep.subr.bf16.mxu0 0
    %256 = vmatpush1.bf16.msra.mxu0 0
    %257 = vmatprep.subr.bf16.mxu0 0
    %258 = vmatpush1.bf16.msra.mxu0 0
    %259 = vmatprep.subr.bf16.mxu0 0
    %260 = vmatpush1.bf16.msra.mxu0 0
    %261 = vmatprep.subr.bf16.mxu0 0
    %262 = vmatpush1.bf16.msra.mxu0 0
    %263 = vmatprep.subr.bf16.mxu0 0
    %264 = vmatpush1.bf16.msra.mxu0 0
    %265 = vmatprep.subr.bf16.mxu0 0
    %266 = vmatpush1.bf16.msra.mxu0 0
    %267 = vmatprep.subr.bf16.mxu0 0
    %268 = vmatpush1.bf16.msra.mxu0 0
    %269 = vmatprep.subr.bf16.mxu0 0
    %270 = vmatpush1.bf16.msra.mxu0 0
    %271 = vmatprep.subr.bf16.mxu0 0
    %272 = vmatpush1.bf16.msra.mxu0 0
    %273 = vmatprep.subr.bf16.mxu0 0
    %274 = vmatpush1.bf16.msra.mxu0 0
    %275 = vmatprep.subr.bf16.mxu0 0
    %276 = vmatpush1.bf16.msra.mxu0 0
    %277 = vmatprep.subr.bf16.mxu0 0
    %278 = vmatpush1.bf16.msra.mxu0 0
    %279 = vmatprep.mubr.bf16.mxu0 0
    %280 = vmatmul.mubr.bf16.gmra.mrb[0].mxu0 %v238
    %v281 = vpop.f32.mrb[0].mxu0
    %v282 = vadd.f32 1e-08, %v281
    %v283 = vpop.f32.mrb[0].mxu0
    %v284 = vpop.f32.mrb[0].mxu0
    %v285 = vpop.f32.mrb[0].mxu0
    %286 = vdwg.mxu0
    %v287 = vrsqrt.pop %v282
    %v288 = vmul.f32 %v282, %v287
    %vm289 = vcmp.eq.f32.partialorder %v282, inf
    %v290 = vsel %vm289, %v282, %v288
    %vm291 = vcmp.eq.f32.partialorder %v282, 0.0
    %v292 = vand.u32 %v282, 2147483648
    %v293 = vsel %vm291, %v292, %v290
    %v294 = vld [vmem:[%s9] sm:$0x3]
    %v295 = vmul.f32 %v293, %v294
    %v297 = vsel %vm236, %v231, 0
    %v300 = vand.u32 %v234, %v243
    %302 = vmatprep.subr.bf16.mxu0 0
    %303 = vmatpush1.bf16.msra.mxu0 %v300
    %304 = vmatprep.subr.bf16.mxu0 0
    %305 = vmatpush1.bf16.msra.mxu0 0
    %306 = vmatprep.subr.bf16.mxu0 0
    %307 = vmatpush1.bf16.msra.mxu0 0
    %308 = vmatprep.subr.bf16.mxu0 0
    %309 = vmatpush1.bf16.msra.mxu0 0
    %310 = vmatprep.subr.bf16.mxu0 0
    %311 = vmatpush1.bf16.msra.mxu0 0
    %312 = vmatprep.subr.bf16.mxu0 0
    %313 = vmatpush1.bf16.msra.mxu0 0
    %314 = vmatprep.subr.bf16.mxu0 0
    %315 = vmatpush1.bf16.msra.mxu0 0
    %316 = vmatprep.subr.bf16.mxu0 0
    %317 = vmatpush1.bf16.msra.mxu0 0
    %318 = vmatprep.subr.bf16.mxu0 0
    %319 = vmatpush1.bf16.msra.mxu0 0
    %320 = vmatprep.subr.bf16.mxu0 0
    %321 = vmatpush1.bf16.msra.mxu0 0
    %322 = vmatprep.subr.bf16.mxu0 0
    %323 = vmatpush1.bf16.msra.mxu0 0
    %324 = vmatprep.subr.bf16.mxu0 0
    %325 = vmatpush1.bf16.msra.mxu0 0
    %326 = vmatprep.subr.bf16.mxu0 0
    %327 = vmatpush1.bf16.msra.mxu0 0
    %328 = vmatprep.subr.bf16.mxu0 0
    %329 = vmatpush1.bf16.msra.mxu0 0
    %330 = vmatprep.subr.bf16.mxu0 0
    %331 = vmatpush1.bf16.msra.mxu0 0
    %332 = vmatprep.subr.bf16.mxu0 0
    %333 = vmatpush1.bf16.msra.mxu0 0
    %334 = vmatprep.mubr.bf16.mxu0 0
    %335 = vmatmul.mubr.bf16.gmra.mrb[0].mxu0 %v297
    %v336 = vpop.f32.mrb[0].mxu0
    %v337 = vadd.f32 %v295, %v336
    %v338 = vpop.f32.mrb[0].mxu0
    %v339 = vpop.f32.mrb[0].mxu0
    %v340 = vpop.f32.mrb[0].mxu0
    %341 = vdwg.mxu0
    %v342 = vmax.f32 %v337, 0.0
    %v343 = vld [vmem:[%s12] sm:$0x7]
    %v344 = vld [vmem:[%s10] sm:$0x7]
    %v345 = vld [vmem:[%s11] sm:$0x7]
    %v346 = vmul.f32 %v345, %v343
    %v347 = vadd.f32 %v344, %v346
    %v348 = vmul.f32 %v347, %v347
    %v349 = vmul.f32 %v348, 10.0427685
    %v350 = vmul.f32 %v343, %v343
    %v351 = vmul.f32 %v350, 0.5
    %v352 = vsub.f32 %v349, %v351
    %vm353 = vcmask 18432
    %v354 = vsel %vm353, %v352, 0.0
    %355 = vadd.xlane.f32.xlu0 %v354
    %v356 = vpop.xlane.xlu0 %355
    %v357 = vrot.slane %v356, 4
    %v358 = vadd.f32 %v356, %v357
    %v359 = vrot.slane %v358, 2
    %v360 = vadd.f32 %v358, %v359
    %v361 = vrot.slane %v360, 1
    %v362 = vadd.f32 %v360, %v361
    %s363 = vtos %v362
    %v364 = vstv %s363
    %v365 = vadd.f32 %v230, %v364
    %v366 = vpack.c.bf16 %v342, %v342
    %v367 = vmul.f32 %v342, %v342
    %v368 = vpack.c.bf16 %v367, %v367
    %v369 = vld [vmem:[%s13] sm:$0x3]
    %v370 = vld [vmem:[%s14] sm:$0x3]
    %v372 = vsel %vm236, %v368, 0
    %v375 = vand.u32 %v370, %v243
    %377 = vmatprep.subr.bf16.mxu0 0
    %378 = vmatpush1.bf16.msra.mxu0 %v375
    %379 = vmatprep.subr.bf16.mxu0 0
    %380 = vmatpush1.bf16.msra.mxu0 0
    %381 = vmatprep.subr.bf16.mxu0 0
    %382 = vmatpush1.bf16.msra.mxu0 0
    %383 = vmatprep.subr.bf16.mxu0 0
    %384 = vmatpush1.bf16.msra.mxu0 0
    %385 = vmatprep.subr.bf16.mxu0 0
    %386 = vmatpush1.bf16.msra.mxu0 0
    %387 = vmatprep.subr.bf16.mxu0 0
    %388 = vmatpush1.bf16.msra.mxu0 0
    %389 = vmatprep.subr.bf16.mxu0 0
    %390 = vmatpush1.bf16.msra.mxu0 0
    %391 = vmatprep.subr.bf16.mxu0 0
    %392 = vmatpush1.bf16.msra.mxu0 0
    %393 = vmatprep.subr.bf16.mxu0 0
    %394 = vmatpush1.bf16.msra.mxu0 0
    %395 = vmatprep.subr.bf16.mxu0 0
    %396 = vmatpush1.bf16.msra.mxu0 0
    %397 = vmatprep.subr.bf16.mxu0 0
    %398 = vmatpush1.bf16.msra.mxu0 0
    %399 = vmatprep.subr.bf16.mxu0 0
    %400 = vmatpush1.bf16.msra.mxu0 0
    %401 = vmatprep.subr.bf16.mxu0 0
    %402 = vmatpush1.bf16.msra.mxu0 0
    %403 = vmatprep.subr.bf16.mxu0 0
    %404 = vmatpush1.bf16.msra.mxu0 0
    %405 = vmatprep.subr.bf16.mxu0 0
    %406 = vmatpush1.bf16.msra.mxu0 0
    %407 = vmatprep.subr.bf16.mxu0 0
    %408 = vmatpush1.bf16.msra.mxu0 0
    %409 = vmatprep.mubr.bf16.mxu0 0
    %410 = vmatmul.mubr.bf16.gmra.mrb[0].mxu0 %v372
    %v411 = vpop.f32.mrb[0].mxu0
    %v412 = vadd.f32 1e-08, %v411
    %v413 = vpop.f32.mrb[0].mxu0
    %v414 = vpop.f32.mrb[0].mxu0
    %v415 = vpop.f32.mrb[0].mxu0
    %416 = vdwg.mxu0
    %v417 = vrsqrt.pop %v412
    %v418 = vmul.f32 %v412, %v417
    %vm419 = vcmp.eq.f32.partialorder %v412, inf
    %v420 = vsel %vm419, %v412, %v418
    %vm421 = vcmp.eq.f32.partialorder %v412, 0.0
    %v422 = vand.u32 %v412, 2147483648
    %v423 = vsel %vm421, %v422, %v420
    %v424 = vld [vmem:[%s15] sm:$0x3]
    %v425 = vmul.f32 %v423, %v424
    %v427 = vsel %vm236, %v366, 0
    %v430 = vand.u32 %v369, %v243
    %432 = vmatprep.subr.bf16.mxu0 0
    %433 = vmatpush1.bf16.msra.mxu0 %v430
    %434 = vmatprep.subr.bf16.mxu0 0
    %435 = vmatpush1.bf16.msra.mxu0 0
    %436 = vmatprep.subr.bf16.mxu0 0
    %437 = vmatpush1.bf16.msra.mxu0 0
    %438 = vmatprep.subr.bf16.mxu0 0
    %439 = vmatpush1.bf16.msra.mxu0 0
    %440 = vmatprep.subr.bf16.mxu0 0
    %441 = vmatpush1.bf16.msra.mxu0 0
    %442 = vmatprep.subr.bf16.mxu0 0
    %443 = vmatpush1.bf16.msra.mxu0 0
    %444 = vmatprep.subr.bf16.mxu0 0
    %445 = vmatpush1.bf16.msra.mxu0 0
    %446 = vmatprep.subr.bf16.mxu0 0
    %447 = vmatpush1.bf16.msra.mxu0 0
    %448 = vmatprep.subr.bf16.mxu0 0
    %449 = vmatpush1.bf16.msra.mxu0 0
    %450 = vmatprep.subr.bf16.mxu0 0
    %451 = vmatpush1.bf16.msra.mxu0 0
    %452 = vmatprep.subr.bf16.mxu0 0
    %453 = vmatpush1.bf16.msra.mxu0 0
    %454 = vmatprep.subr.bf16.mxu0 0
    %455 = vmatpush1.bf16.msra.mxu0 0
    %456 = vmatprep.subr.bf16.mxu0 0
    %457 = vmatpush1.bf16.msra.mxu0 0
    %458 = vmatprep.subr.bf16.mxu0 0
    %459 = vmatpush1.bf16.msra.mxu0 0
    %460 = vmatprep.subr.bf16.mxu0 0
    %461 = vmatpush1.bf16.msra.mxu0 0
    %462 = vmatprep.subr.bf16.mxu0 0
    %463 = vmatpush1.bf16.msra.mxu0 0
    %464 = vmatprep.mubr.bf16.mxu0 0
    %465 = vmatmul.mubr.bf16.gmra.mrb[0].mxu0 %v427
    %v466 = vpop.f32.mrb[0].mxu0
    %v467 = vadd.f32 %v425, %v466
    %v468 = vpop.f32.mrb[0].mxu0
    %v469 = vpop.f32.mrb[0].mxu0
    %v470 = vpop.f32.mrb[0].mxu0
    %471 = vdwg.mxu0
    %v472 = vld [vmem:[%s18] sm:$0xf]
    %v473 = vld [vmem:[%s16] sm:$0xf]
    %v474 = vld [vmem:[%s17] sm:$0xf]
    %v475 = vmul.f32 %v474, %v472
    %v476 = vadd.f32 %v473, %v475
    %v477 = vmul.f32 %v476, %v476
    %v478 = vmul.f32 %v477, 10.0427685
    %v479 = vmul.f32 %v472, %v472
    %v480 = vmul.f32 %v479, 0.5
    %v481 = vsub.f32 %v478, %v480
    %vm482 = vcmask 19456
    %v483 = vsel %vm482, %v481, 0.0
    %484 = vadd.xlane.f32.xlu0 %v483
    %v485 = vpop.xlane.xlu0 %484
    %v486 = vrot.slane %v485, 4
    %v487 = vadd.f32 %v485, %v486
    %v488 = vrot.slane %v487, 2
    %v489 = vadd.f32 %v487, %v488
    %v490 = vrot.slane %v489, 1
    %v491 = vadd.f32 %v489, %v490
    %s492 = vtos %v491
    %v493 = vstv %s492
    %v494 = vadd.f32 %v365, %v493
    %vm495 = vcmask 25600
    %496 = vst.msk [vmem:[#allocation7] sm:$0x3] %vm495, %v467
    %vm497 = vcmask 0
    %498 = vst.msk [vmem:[#allocation8] sm:$0x1] %vm497, %v494
    // Predicated region
    $region86: #{tpu_custom_call.1} parent=1 // pred_check
      _
    $region87: #{tpu_custom_call.1} parent=1 // pred_check_branch
      %500 = sbr.rel (0) target = $region89
    $region88: #{tpu_custom_call.1} parent=1 // pred_region
      %s502 = ssub.s32 32, 32
      %503 = vsyncadd [#allocation4], %s502
      %s505 = sshll.u32 [#allocation7], 4
      %s506 = int_to_ptr.vmem [resolvable:$true] %s505
      %508 = dma.vmem_to_hbm [thread:$0]  %s506, 32, %s19, [#allocation4]
    $region89: #{tpu_custom_call.1} parent=1 // pred_fallthru
      _
    // Predicated region
    $region90: #{tpu_custom_call.1} parent=1 // pred_check
      _
    $region91: #{tpu_custom_call.1} parent=1 // pred_check_branch
      %510 = sbr.rel (0) target = $region93
    $region92: #{tpu_custom_call.1} parent=1 // pred_region
      %s512 = ssub.s32 16, 16
      %513 = vsyncadd [#allocation9], %s512
      %s515 = sshll.u32 [#allocation8], 4
      %s516 = int_to_ptr.vmem [resolvable:$true] %s515
      %518 = dma.vmem_to_hbm [thread:$0]  %s516, 16, %s20, [#allocation9]
    $region93: #{tpu_custom_call.1} parent=1 // pred_fallthru
      _
    // Predicated region
    $region94: #{tpu_custom_call.1} parent=1 // pred_check
      _
    $region95: #{tpu_custom_call.1} parent=1 // pred_check_branch
      %520 = sbr.rel (0) target = $region97
    $region96: #{tpu_custom_call.1} parent=1 // pred_region
      %521 = dma.done [#allocation4], 32
    $region97: #{tpu_custom_call.1} parent=1 // pred_fallthru
      _
    // Predicated region
    $region98: #{tpu_custom_call.1} parent=1 // pred_check
      _
    $region99: #{tpu_custom_call.1} parent=1 // pred_check_branch
      %523 = sbr.rel (0) target = $region101
    $region100: #{tpu_custom_call.1} parent=1 // pred_region
      %524 = dma.done [#allocation9], 16
    $region101: #{tpu_custom_call.1} parent=1 // pred_fallthru
      _
    %525 = vsyncpa [#allocation3], 1
    %526 = vsyncpa [#allocation6], 1
    %527 = vsyncpa [#allocation4], 1
    %528 = vsyncpa [#allocation9], 1

</llo_original>
